<compile_context>
chip_gen: v6e
topology: v6e:2x2x1
jax: 0.10.0
libtpu: 0.0.40
codegen_flags: <defaults>
</compile_context>

<pallas_src>
import jax
import jax.numpy as jnp
from jax import lax
from jax.experimental import pallas as pl
from jax.experimental.pallas import tpu as pltpu


def lstm_fc_kernel(x2d_ref, wih_ref, whh_ref, b_ref, wfc_ref, bfc_ref,
                   out_ref, xw_scr):
    """LSTM recurrence + final Linear, fully VMEM-resident.

    x2d_ref: (T*Bp, D)   time-major flattened input (row t*Bp+b = step t, batch b)
    wih_ref: (D, 4H)     input->gates weights, gate cols ordered [i, f, o, g]
    whh_ref: (H, 4H)     hidden->gates weights, same gate order
    b_ref:   (1, 4H)     (bias_ih + bias_hh), same gate order
    wfc_ref: (1, H)      fc weight row
    bfc_ref: (1, 1)      fc bias
    out_ref: (Bp, 1)     fc output (lane-narrow store is negligible at N=1)
    xw_scr:  (T*Bp, 4H)  scratch for the hoisted input projection
    """
    H = whh_ref.shape[0]
    Bp = out_ref.shape[0]
    TB = x2d_ref.shape[0]
    T = TB // Bp
    D = x2d_ref.shape[1]

    # Hoisted input projection for every timestep.
    # For tiny D (default D=2) a D-term VPU broadcast-FMA beats an MXU call
    # with K=2; for larger D fall back to a single batched matmul.
    if D <= 8:
        xw = x2d_ref[:, 0:1] * wih_ref[0:1, :]
        for d in range(1, D):
            xw = xw + x2d_ref[:, d:d + 1] * wih_ref[d:d + 1, :]
    else:
        xw = jnp.dot(x2d_ref[...], wih_ref[...],
                     preferred_element_type=jnp.float32)
    xw_scr[...] = xw + b_ref[...]

    h0 = jnp.zeros((Bp, H), jnp.float32)
    c0 = jnp.zeros((Bp, H), jnp.float32)

    def step(t, carry):
        h, c = carry
        row = pl.multiple_of(t * Bp, Bp)                 # Bp is a multiple of 8
        gates = (
            xw_scr[pl.ds(row, Bp), :]
            + jnp.dot(h, whh_ref[...], preferred_element_type=jnp.float32)
        )                                                # (Bp, 4H), [i|f|o|g]
        sig = jax.nn.sigmoid(gates[:, :3 * H])           # one EUP pass: i, f, o
        i_g = sig[:, 0 * H:1 * H]
        f_g = sig[:, 1 * H:2 * H]
        o_g = sig[:, 2 * H:3 * H]
        g_g = jnp.tanh(gates[:, 3 * H:4 * H])            # one EUP pass: g
        c_new = f_g * c + i_g * g_g
        h_new = o_g * jnp.tanh(c_new)
        return (h_new, c_new)

    # Serial recurrence; cap the unroll so long T doesn't blow up imem/vregs.
    h_T, _ = lax.fori_loop(0, T, step, (h0, c0), unroll=min(T, 8))

    # Final Linear head on h_T (== h[-1] for a 1-layer LSTM):
    # (Bp,H)x(H,1) done as VPU multiply + lane reduce instead of an N=1 MXU call.
    out_ref[...] = (
        jnp.sum(h_T * wfc_ref[...], axis=-1, keepdims=True) + bfc_ref[...]
    )


def pack_params(params):
    """Reorder the packed gate blocks from torch's [i, f, g, o] to [i, f, o, g].

    No padding: gates stay at their natural 4H width.  The reorder lets the
    kernel apply one sigmoid over cols 0:3H and one tanh over cols 3H:4H.
    """
    def reorder(w):                                      # (..., 4H) -> (..., 4H)
        i, f, g, o = jnp.split(w, 4, axis=-1)
        return jnp.concatenate([i, f, o, g], axis=-1)

    return {
        "wih": reorder(params["wih_t"]),                 # (D, 4H)
        "whh": reorder(params["whh_t"]),                 # (H, 4H)
        "b": reorder(params["b"]),                       # (1, 4H)
        "wfc": params["wfc_t"].T,                        # (1, H)
        "bfc": params["bfc"],                            # (1, 1)
    }


def _tile_padded_bytes(shape, dtype):
    """Bytes of a buffer after (8, 128) tile padding of the last two dims."""
    s = list(shape)
    if len(s) >= 1:
        s[-1] = -(-s[-1] // 128) * 128
    if len(s) >= 2:
        s[-2] = -(-s[-2] // 8) * 8
    n = 1
    for d in s:
        n *= d
    return n * jnp.dtype(dtype).itemsize


def lstm_model_forward(x, packed):
    """x: (B, T, D) float32  ->  (B, 1) float32."""
    B, T, D = x.shape
    H = packed["whh"].shape[0]

    # Pad batch to a multiple of 8 so per-step slices stay sublane-aligned.
    Bp = -(-B // 8) * 8
    if Bp != B:
        x = jnp.pad(x, ((0, Bp - B), (0, 0), (0, 0)))

    # Time-major flatten: row t*Bp + b holds timestep t of batch element b.
    x2d = jnp.transpose(x, (1, 0, 2)).reshape(T * Bp, D)

    # Size the scoped-VMEM limit from the actual (tile-padded) buffers.
    buf_bytes = (
        _tile_padded_bytes((T * Bp, D), jnp.float32)          # x2d
        + _tile_padded_bytes((D, 4 * H), jnp.float32)         # wih
        + _tile_padded_bytes((H, 4 * H), jnp.float32)         # whh
        + _tile_padded_bytes((1, 4 * H), jnp.float32)         # b
        + _tile_padded_bytes((1, H), jnp.float32)             # wfc
        + _tile_padded_bytes((1, 1), jnp.float32)             # bfc
        + _tile_padded_bytes((Bp, 1), jnp.float32)            # out
        + _tile_padded_bytes((T * Bp, 4 * H), jnp.float32)    # xw scratch
    )
    vmem_limit = int(min(max(2 * buf_bytes + (1 << 20), 32 << 20), 64 << 20))

    vmem_spec = pl.BlockSpec(memory_space=pltpu.MemorySpace.VMEM)
    out = pl.pallas_call(
        lstm_fc_kernel,
        out_shape=jax.ShapeDtypeStruct((Bp, 1), jnp.float32),
        in_specs=[vmem_spec] * 6,
        out_specs=vmem_spec,
        scratch_shapes=[
            pltpu.VMEM((T * Bp, 4 * H), jnp.float32),    # hoisted x @ Wih + b
        ],
        compiler_params=pltpu.CompilerParams(vmem_limit_bytes=vmem_limit),
    )(x2d, packed["wih"], packed["whh"], packed["b"],
      packed["wfc"], packed["bfc"])
    return out[:B]


def init_params(key, input_dim, hidden_dim):
    """Deterministic init matching torch LSTM/Linear shapes (U(-k, k), k=1/sqrt(H))."""
    k = 1.0 / jnp.sqrt(jnp.float32(hidden_dim))
    ks = jax.random.split(key, 6)
    w_ih = jax.random.uniform(ks[0], (4 * hidden_dim, input_dim), jnp.float32, -k, k)
    w_hh = jax.random.uniform(ks[1], (4 * hidden_dim, hidden_dim), jnp.float32, -k, k)
    b_ih = jax.random.uniform(ks[2], (4 * hidden_dim,), jnp.float32, -k, k)
    b_hh = jax.random.uniform(ks[3], (4 * hidden_dim,), jnp.float32, -k, k)
    w_fc = jax.random.uniform(ks[4], (1, hidden_dim), jnp.float32, -k, k)
    b_fc = jax.random.uniform(ks[5], (1,), jnp.float32, -k, k)
    return {
        "wih_t": w_ih.T,                                 # (D, 4H), gate order [i,f,g,o]
        "whh_t": w_hh.T,                                 # (H, 4H)
        "b": (b_ih + b_hh).reshape(1, -1),               # (1, 4H)
        "wfc_t": w_fc.T,                                 # (H, 1)
        "bfc": b_fc.reshape(1, 1),                       # (1, 1)
    }


def lstm_model_ref(x, params):
    """Pure-JAX reference of the same forward pass (torch gate order [i,f,g,o])."""
    B, T, D = x.shape
    H = params["whh_t"].shape[0]
    h = jnp.zeros((B, H), jnp.float32)
    c = jnp.zeros((B, H), jnp.float32)

    def step(carry, x_t):
        h, c = carry
        gates = x_t @ params["wih_t"] + h @ params["whh_t"] + params["b"]
        i = jax.nn.sigmoid(gates[:, 0 * H:1 * H])
        f = jax.nn.sigmoid(gates[:, 1 * H:2 * H])
        g = jnp.tanh(gates[:, 2 * H:3 * H])
        o = jax.nn.sigmoid(gates[:, 3 * H:4 * H])
        c = f * c + i * g
        h = o * jnp.tanh(c)
        return (h, c), None

    (h, _), _ = lax.scan(step, (h, c), jnp.transpose(x, (1, 0, 2)))
    return h @ params["wfc_t"] + params["bfc"]


if __name__ == "__main__":
    B, T, D, H = 8, 8, 2, 64                             # module defaults: input_dim=2, hidden_dim=64
    key = jax.random.PRNGKey(0)
    kx, kp = jax.random.split(key)
    x = jax.random.normal(kx, (B, T, D), jnp.float32)
    params = init_params(kp, D, H)
    packed = pack_params(params)                         # one-time weight packing

    out = lstm_model_forward(x, packed)
    out = jax.block_until_ready(out)

    ref = lstm_model_ref(x, params)
    assert out.shape == (B, 1)
    assert jnp.allclose(out, ref, atol=1e-5, rtol=1e-5), "mismatch vs reference"

    print("KERNEL_OK")
</pallas_src>

<mosaic_0001>
module attributes {stable_mosaic.version = 11 : i64} {
  func.func @lstm_fc_kernel(%arg0: memref<64x2xf32, #tpu.memory_space<vmem>>, %arg1: memref<2x256xf32, #tpu.memory_space<vmem>>, %arg2: memref<64x256xf32, #tpu.memory_space<vmem>>, %arg3: memref<1x256xf32, #tpu.memory_space<vmem>>, %arg4: memref<1x64xf32, #tpu.memory_space<vmem>>, %arg5: memref<1x1xf32, #tpu.memory_space<vmem>>, %arg6: memref<8x1xf32, #tpu.memory_space<vmem>>, %arg7: memref<64x256xf32, #tpu.memory_space<vmem>>) attributes {dimension_semantics = [], scalar_prefetch = 0 : i64, scratch_operands = 1 : i64, tpu.core_type = #tpu.core_type<tc>} {
    %c0 = arith.constant 0 : index
    %c0_0 = arith.constant 0 : index
    %0 = vector.load %arg0[%c0, %c0_0] : memref<64x2xf32, #tpu.memory_space<vmem>>, vector<64x1xf32>
    %c0_1 = arith.constant 0 : index
    %c0_2 = arith.constant 0 : index
    %1 = vector.load %arg1[%c0_1, %c0_2] : memref<2x256xf32, #tpu.memory_space<vmem>>, vector<1x256xf32>
    %2 = vector.broadcast %0 : vector<64x1xf32> to vector<64x256xf32>
    %3 = vector.broadcast %1 : vector<1x256xf32> to vector<64x256xf32>
    %4 = arith.mulf %2, %3 : vector<64x256xf32>
    %c0_3 = arith.constant 0 : index
    %c1 = arith.constant 1 : index
    %5 = vector.load %arg0[%c0_3, %c1] : memref<64x2xf32, #tpu.memory_space<vmem>>, vector<64x1xf32>
    %c1_4 = arith.constant 1 : index
    %c0_5 = arith.constant 0 : index
    %6 = vector.load %arg1[%c1_4, %c0_5] : memref<2x256xf32, #tpu.memory_space<vmem>>, vector<1x256xf32>
    %7 = vector.broadcast %5 : vector<64x1xf32> to vector<64x256xf32>
    %8 = vector.broadcast %6 : vector<1x256xf32> to vector<64x256xf32>
    %9 = arith.mulf %7, %8 : vector<64x256xf32>
    %10 = arith.addf %4, %9 : vector<64x256xf32>
    %c0_6 = arith.constant 0 : index
    %c0_7 = arith.constant 0 : index
    %11 = vector.load %arg3[%c0_6, %c0_7] : memref<1x256xf32, #tpu.memory_space<vmem>>, vector<1x256xf32>
    %12 = vector.broadcast %11 : vector<1x256xf32> to vector<64x256xf32>
    %13 = arith.addf %10, %12 : vector<64x256xf32>
    %c0_8 = arith.constant 0 : index
    %c0_9 = arith.constant 0 : index
    %14 = vector.load %arg7[%c0_8, %c0_9] : memref<64x256xf32, #tpu.memory_space<vmem>>, vector<64x256xf32>
    tpu.vector_store %arg7[%c0_8, %c0_9], %13 {strides = array<i32>} : memref<64x256xf32, #tpu.memory_space<vmem>>, vector<64x256xf32>,
    %cst = arith.constant 0.000000e+00 : f32
    %15 = vector.broadcast %cst : f32 to vector<8x64xf32>
    %cst_10 = arith.constant 0.000000e+00 : f32
    %16 = vector.broadcast %cst_10 : f32 to vector<8x64xf32>
    %c0_i32 = arith.constant 0 : i32
    %c8_i32 = arith.constant 8 : i32
    %17 = arith.muli %c0_i32, %c8_i32 : i32
    %18 = tpu.assume_multiple %17, 8 : i32
    %19 = arith.index_cast %18 : i32 to index
    %c0_11 = arith.constant 0 : index
    %20 = vector.load %arg7[%19, %c0_11] : memref<64x256xf32, #tpu.memory_space<vmem>>, vector<8x256xf32>
    %c0_12 = arith.constant 0 : index
    %c0_13 = arith.constant 0 : index
    %21 = vector.load %arg2[%c0_12, %c0_13] : memref<64x256xf32, #tpu.memory_space<vmem>>, vector<64x256xf32>
    %cst_14 = arith.constant dense<0.000000e+00> : vector<8x256xf32>
    %22 = tpu.matmul %15, %21, %cst_14 {dimension_numbers = #tpu.dot_dimension_numbers<[1], [0], [0], [1], [0, 0, 1, 1], [], []>} : vector<8x64xf32>, vector<64x256xf32>, vector<8x256xf32> -> vector<8x256xf32>
    %23 = arith.addf %20, %22 : vector<8x256xf32>
    %24 = vector.extract_strided_slice %23 {offsets = [0, 0], sizes = [8, 192], strides = [1, 1]} : vector<8x256xf32> to vector<8x192xf32>
    %25 = arith.negf %24 : vector<8x192xf32>
    %26 = math.exp %25 : vector<8x192xf32>
    %cst_15 = arith.constant 1.000000e+00 : f32
    %27 = vector.broadcast %cst_15 : f32 to vector<8x192xf32>
    %28 = arith.addf %27, %26 : vector<8x192xf32>
    %29 = arith.divf %27, %28 : vector<8x192xf32>
    %30 = vector.extract_strided_slice %29 {offsets = [0, 0], sizes = [8, 64], strides = [1, 1]} : vector<8x192xf32> to vector<8x64xf32>
    %31 = vector.extract_strided_slice %29 {offsets = [0, 64], sizes = [8, 64], strides = [1, 1]} : vector<8x192xf32> to vector<8x64xf32>
    %32 = vector.extract_strided_slice %29 {offsets = [0, 128], sizes = [8, 64], strides = [1, 1]} : vector<8x192xf32> to vector<8x64xf32>
    %33 = vector.extract_strided_slice %23 {offsets = [0, 192], sizes = [8, 64], strides = [1, 1]} : vector<8x256xf32> to vector<8x64xf32>
    %34 = math.tanh %33 : vector<8x64xf32>
    %35 = arith.mulf %31, %16 : vector<8x64xf32>
    %36 = arith.mulf %30, %34 : vector<8x64xf32>
    %37 = arith.addf %35, %36 : vector<8x64xf32>
    %38 = math.tanh %37 : vector<8x64xf32>
    %39 = arith.mulf %32, %38 : vector<8x64xf32>
    %c1_i32 = arith.constant 1 : i32
    %c8_i32_16 = arith.constant 8 : i32
    %40 = arith.muli %c1_i32, %c8_i32_16 : i32
    %41 = tpu.assume_multiple %40, 8 : i32
    %42 = arith.index_cast %41 : i32 to index
    %c0_17 = arith.constant 0 : index
    %43 = vector.load %arg7[%42, %c0_17] : memref<64x256xf32, #tpu.memory_space<vmem>>, vector<8x256xf32>
    %c0_18 = arith.constant 0 : index
    %c0_19 = arith.constant 0 : index
    %44 = vector.load %arg2[%c0_18, %c0_19] : memref<64x256xf32, #tpu.memory_space<vmem>>, vector<64x256xf32>
    %cst_20 = arith.constant dense<0.000000e+00> : vector<8x256xf32>
    %45 = tpu.matmul %39, %44, %cst_20 {dimension_numbers = #tpu.dot_dimension_numbers<[1], [0], [0], [1], [0, 0, 1, 1], [], []>} : vector<8x64xf32>, vector<64x256xf32>, vector<8x256xf32> -> vector<8x256xf32>
    %46 = arith.addf %43, %45 : vector<8x256xf32>
    %47 = vector.extract_strided_slice %46 {offsets = [0, 0], sizes = [8, 192], strides = [1, 1]} : vector<8x256xf32> to vector<8x192xf32>
    %48 = arith.negf %47 : vector<8x192xf32>
    %49 = math.exp %48 : vector<8x192xf32>
    %cst_21 = arith.constant 1.000000e+00 : f32
    %50 = vector.broadcast %cst_21 : f32 to vector<8x192xf32>
    %51 = arith.addf %50, %49 : vector<8x192xf32>
    %52 = arith.divf %50, %51 : vector<8x192xf32>
    %53 = vector.extract_strided_slice %52 {offsets = [0, 0], sizes = [8, 64], strides = [1, 1]} : vector<8x192xf32> to vector<8x64xf32>
    %54 = vector.extract_strided_slice %52 {offsets = [0, 64], sizes = [8, 64], strides = [1, 1]} : vector<8x192xf32> to vector<8x64xf32>
    %55 = vector.extract_strided_slice %52 {offsets = [0, 128], sizes = [8, 64], strides = [1, 1]} : vector<8x192xf32> to vector<8x64xf32>
    %56 = vector.extract_strided_slice %46 {offsets = [0, 192], sizes = [8, 64], strides = [1, 1]} : vector<8x256xf32> to vector<8x64xf32>
    %57 = math.tanh %56 : vector<8x64xf32>
    %58 = arith.mulf %54, %37 : vector<8x64xf32>
    %59 = arith.mulf %53, %57 : vector<8x64xf32>
    %60 = arith.addf %58, %59 : vector<8x64xf32>
    %61 = math.tanh %60 : vector<8x64xf32>
    %62 = arith.mulf %55, %61 : vector<8x64xf32>
    %c2_i32 = arith.constant 2 : i32
    %c8_i32_22 = arith.constant 8 : i32
    %63 = arith.muli %c2_i32, %c8_i32_22 : i32
    %64 = tpu.assume_multiple %63, 8 : i32
    %65 = arith.index_cast %64 : i32 to index
    %c0_23 = arith.constant 0 : index
    %66 = vector.load %arg7[%65, %c0_23] : memref<64x256xf32, #tpu.memory_space<vmem>>, vector<8x256xf32>
    %c0_24 = arith.constant 0 : index
    %c0_25 = arith.constant 0 : index
    %67 = vector.load %arg2[%c0_24, %c0_25] : memref<64x256xf32, #tpu.memory_space<vmem>>, vector<64x256xf32>
    %cst_26 = arith.constant dense<0.000000e+00> : vector<8x256xf32>
    %68 = tpu.matmul %62, %67, %cst_26 {dimension_numbers = #tpu.dot_dimension_numbers<[1], [0], [0], [1], [0, 0, 1, 1], [], []>} : vector<8x64xf32>, vector<64x256xf32>, vector<8x256xf32> -> vector<8x256xf32>
    %69 = arith.addf %66, %68 : vector<8x256xf32>
    %70 = vector.extract_strided_slice %69 {offsets = [0, 0], sizes = [8, 192], strides = [1, 1]} : vector<8x256xf32> to vector<8x192xf32>
    %71 = arith.negf %70 : vector<8x192xf32>
    %72 = math.exp %71 : vector<8x192xf32>
    %cst_27 = arith.constant 1.000000e+00 : f32
    %73 = vector.broadcast %cst_27 : f32 to vector<8x192xf32>
    %74 = arith.addf %73, %72 : vector<8x192xf32>
    %75 = arith.divf %73, %74 : vector<8x192xf32>
    %76 = vector.extract_strided_slice %75 {offsets = [0, 0], sizes = [8, 64], strides = [1, 1]} : vector<8x192xf32> to vector<8x64xf32>
    %77 = vector.extract_strided_slice %75 {offsets = [0, 64], sizes = [8, 64], strides = [1, 1]} : vector<8x192xf32> to vector<8x64xf32>
    %78 = vector.extract_strided_slice %75 {offsets = [0, 128], sizes = [8, 64], strides = [1, 1]} : vector<8x192xf32> to vector<8x64xf32>
    %79 = vector.extract_strided_slice %69 {offsets = [0, 192], sizes = [8, 64], strides = [1, 1]} : vector<8x256xf32> to vector<8x64xf32>
    %80 = math.tanh %79 : vector<8x64xf32>
    %81 = arith.mulf %77, %60 : vector<8x64xf32>
    %82 = arith.mulf %76, %80 : vector<8x64xf32>
    %83 = arith.addf %81, %82 : vector<8x64xf32>
    %84 = math.tanh %83 : vector<8x64xf32>
    %85 = arith.mulf %78, %84 : vector<8x64xf32>
    %c3_i32 = arith.constant 3 : i32
    %c8_i32_28 = arith.constant 8 : i32
    %86 = arith.muli %c3_i32, %c8_i32_28 : i32
    %87 = tpu.assume_multiple %86, 8 : i32
    %88 = arith.index_cast %87 : i32 to index
    %c0_29 = arith.constant 0 : index
    %89 = vector.load %arg7[%88, %c0_29] : memref<64x256xf32, #tpu.memory_space<vmem>>, vector<8x256xf32>
    %c0_30 = arith.constant 0 : index
    %c0_31 = arith.constant 0 : index
    %90 = vector.load %arg2[%c0_30, %c0_31] : memref<64x256xf32, #tpu.memory_space<vmem>>, vector<64x256xf32>
    %cst_32 = arith.constant dense<0.000000e+00> : vector<8x256xf32>
    %91 = tpu.matmul %85, %90, %cst_32 {dimension_numbers = #tpu.dot_dimension_numbers<[1], [0], [0], [1], [0, 0, 1, 1], [], []>} : vector<8x64xf32>, vector<64x256xf32>, vector<8x256xf32> -> vector<8x256xf32>
    %92 = arith.addf %89, %91 : vector<8x256xf32>
    %93 = vector.extract_strided_slice %92 {offsets = [0, 0], sizes = [8, 192], strides = [1, 1]} : vector<8x256xf32> to vector<8x192xf32>
    %94 = arith.negf %93 : vector<8x192xf32>
    %95 = math.exp %94 : vector<8x192xf32>
    %cst_33 = arith.constant 1.000000e+00 : f32
    %96 = vector.broadcast %cst_33 : f32 to vector<8x192xf32>
    %97 = arith.addf %96, %95 : vector<8x192xf32>
    %98 = arith.divf %96, %97 : vector<8x192xf32>
    %99 = vector.extract_strided_slice %98 {offsets = [0, 0], sizes = [8, 64], strides = [1, 1]} : vector<8x192xf32> to vector<8x64xf32>
    %100 = vector.extract_strided_slice %98 {offsets = [0, 64], sizes = [8, 64], strides = [1, 1]} : vector<8x192xf32> to vector<8x64xf32>
    %101 = vector.extract_strided_slice %98 {offsets = [0, 128], sizes = [8, 64], strides = [1, 1]} : vector<8x192xf32> to vector<8x64xf32>
    %102 = vector.extract_strided_slice %92 {offsets = [0, 192], sizes = [8, 64], strides = [1, 1]} : vector<8x256xf32> to vector<8x64xf32>
    %103 = math.tanh %102 : vector<8x64xf32>
    %104 = arith.mulf %100, %83 : vector<8x64xf32>
    %105 = arith.mulf %99, %103 : vector<8x64xf32>
    %106 = arith.addf %104, %105 : vector<8x64xf32>
    %107 = math.tanh %106 : vector<8x64xf32>
    %108 = arith.mulf %101, %107 : vector<8x64xf32>
    %c4_i32 = arith.constant 4 : i32
    %c8_i32_34 = arith.constant 8 : i32
    %109 = arith.muli %c4_i32, %c8_i32_34 : i32
    %110 = tpu.assume_multiple %109, 8 : i32
    %111 = arith.index_cast %110 : i32 to index
    %c0_35 = arith.constant 0 : index
    %112 = vector.load %arg7[%111, %c0_35] : memref<64x256xf32, #tpu.memory_space<vmem>>, vector<8x256xf32>
    %c0_36 = arith.constant 0 : index
    %c0_37 = arith.constant 0 : index
    %113 = vector.load %arg2[%c0_36, %c0_37] : memref<64x256xf32, #tpu.memory_space<vmem>>, vector<64x256xf32>
    %cst_38 = arith.constant dense<0.000000e+00> : vector<8x256xf32>
    %114 = tpu.matmul %108, %113, %cst_38 {dimension_numbers = #tpu.dot_dimension_numbers<[1], [0], [0], [1], [0, 0, 1, 1], [], []>} : vector<8x64xf32>, vector<64x256xf32>, vector<8x256xf32> -> vector<8x256xf32>
    %115 = arith.addf %112, %114 : vector<8x256xf32>
    %116 = vector.extract_strided_slice %115 {offsets = [0, 0], sizes = [8, 192], strides = [1, 1]} : vector<8x256xf32> to vector<8x192xf32>
    %117 = arith.negf %116 : vector<8x192xf32>
    %118 = math.exp %117 : vector<8x192xf32>
    %cst_39 = arith.constant 1.000000e+00 : f32
    %119 = vector.broadcast %cst_39 : f32 to vector<8x192xf32>
    %120 = arith.addf %119, %118 : vector<8x192xf32>
    %121 = arith.divf %119, %120 : vector<8x192xf32>
    %122 = vector.extract_strided_slice %121 {offsets = [0, 0], sizes = [8, 64], strides = [1, 1]} : vector<8x192xf32> to vector<8x64xf32>
    %123 = vector.extract_strided_slice %121 {offsets = [0, 64], sizes = [8, 64], strides = [1, 1]} : vector<8x192xf32> to vector<8x64xf32>
    %124 = vector.extract_strided_slice %121 {offsets = [0, 128], sizes = [8, 64], strides = [1, 1]} : vector<8x192xf32> to vector<8x64xf32>
    %125 = vector.extract_strided_slice %115 {offsets = [0, 192], sizes = [8, 64], strides = [1, 1]} : vector<8x256xf32> to vector<8x64xf32>
    %126 = math.tanh %125 : vector<8x64xf32>
    %127 = arith.mulf %123, %106 : vector<8x64xf32>
    %128 = arith.mulf %122, %126 : vector<8x64xf32>
    %129 = arith.addf %127, %128 : vector<8x64xf32>
    %130 = math.tanh %129 : vector<8x64xf32>
    %131 = arith.mulf %124, %130 : vector<8x64xf32>
    %c5_i32 = arith.constant 5 : i32
    %c8_i32_40 = arith.constant 8 : i32
    %132 = arith.muli %c5_i32, %c8_i32_40 : i32
    %133 = tpu.assume_multiple %132, 8 : i32
    %134 = arith.index_cast %133 : i32 to index
    %c0_41 = arith.constant 0 : index
    %135 = vector.load %arg7[%134, %c0_41] : memref<64x256xf32, #tpu.memory_space<vmem>>, vector<8x256xf32>
    %c0_42 = arith.constant 0 : index
    %c0_43 = arith.constant 0 : index
    %136 = vector.load %arg2[%c0_42, %c0_43] : memref<64x256xf32, #tpu.memory_space<vmem>>, vector<64x256xf32>
    %cst_44 = arith.constant dense<0.000000e+00> : vector<8x256xf32>
    %137 = tpu.matmul %131, %136, %cst_44 {dimension_numbers = #tpu.dot_dimension_numbers<[1], [0], [0], [1], [0, 0, 1, 1], [], []>} : vector<8x64xf32>, vector<64x256xf32>, vector<8x256xf32> -> vector<8x256xf32>
    %138 = arith.addf %135, %137 : vector<8x256xf32>
    %139 = vector.extract_strided_slice %138 {offsets = [0, 0], sizes = [8, 192], strides = [1, 1]} : vector<8x256xf32> to vector<8x192xf32>
    %140 = arith.negf %139 : vector<8x192xf32>
    %141 = math.exp %140 : vector<8x192xf32>
    %cst_45 = arith.constant 1.000000e+00 : f32
    %142 = vector.broadcast %cst_45 : f32 to vector<8x192xf32>
    %143 = arith.addf %142, %141 : vector<8x192xf32>
    %144 = arith.divf %142, %143 : vector<8x192xf32>
    %145 = vector.extract_strided_slice %144 {offsets = [0, 0], sizes = [8, 64], strides = [1, 1]} : vector<8x192xf32> to vector<8x64xf32>
    %146 = vector.extract_strided_slice %144 {offsets = [0, 64], sizes = [8, 64], strides = [1, 1]} : vector<8x192xf32> to vector<8x64xf32>
    %147 = vector.extract_strided_slice %144 {offsets = [0, 128], sizes = [8, 64], strides = [1, 1]} : vector<8x192xf32> to vector<8x64xf32>
    %148 = vector.extract_strided_slice %138 {offsets = [0, 192], sizes = [8, 64], strides = [1, 1]} : vector<8x256xf32> to vector<8x64xf32>
    %149 = math.tanh %148 : vector<8x64xf32>
    %150 = arith.mulf %146, %129 : vector<8x64xf32>
    %151 = arith.mulf %145, %149 : vector<8x64xf32>
    %152 = arith.addf %150, %151 : vector<8x64xf32>
    %153 = math.tanh %152 : vector<8x64xf32>
    %154 = arith.mulf %147, %153 : vector<8x64xf32>
    %c6_i32 = arith.constant 6 : i32
    %c8_i32_46 = arith.constant 8 : i32
    %155 = arith.muli %c6_i32, %c8_i32_46 : i32
    %156 = tpu.assume_multiple %155, 8 : i32
    %157 = arith.index_cast %156 : i32 to index
    %c0_47 = arith.constant 0 : index
    %158 = vector.load %arg7[%157, %c0_47] : memref<64x256xf32, #tpu.memory_space<vmem>>, vector<8x256xf32>
    %c0_48 = arith.constant 0 : index
    %c0_49 = arith.constant 0 : index
    %159 = vector.load %arg2[%c0_48, %c0_49] : memref<64x256xf32, #tpu.memory_space<vmem>>, vector<64x256xf32>
    %cst_50 = arith.constant dense<0.000000e+00> : vector<8x256xf32>
    %160 = tpu.matmul %154, %159, %cst_50 {dimension_numbers = #tpu.dot_dimension_numbers<[1], [0], [0], [1], [0, 0, 1, 1], [], []>} : vector<8x64xf32>, vector<64x256xf32>, vector<8x256xf32> -> vector<8x256xf32>
    %161 = arith.addf %158, %160 : vector<8x256xf32>
    %162 = vector.extract_strided_slice %161 {offsets = [0, 0], sizes = [8, 192], strides = [1, 1]} : vector<8x256xf32> to vector<8x192xf32>
    %163 = arith.negf %162 : vector<8x192xf32>
    %164 = math.exp %163 : vector<8x192xf32>
    %cst_51 = arith.constant 1.000000e+00 : f32
    %165 = vector.broadcast %cst_51 : f32 to vector<8x192xf32>
    %166 = arith.addf %165, %164 : vector<8x192xf32>
    %167 = arith.divf %165, %166 : vector<8x192xf32>
    %168 = vector.extract_strided_slice %167 {offsets = [0, 0], sizes = [8, 64], strides = [1, 1]} : vector<8x192xf32> to vector<8x64xf32>
    %169 = vector.extract_strided_slice %167 {offsets = [0, 64], sizes = [8, 64], strides = [1, 1]} : vector<8x192xf32> to vector<8x64xf32>
    %170 = vector.extract_strided_slice %167 {offsets = [0, 128], sizes = [8, 64], strides = [1, 1]} : vector<8x192xf32> to vector<8x64xf32>
    %171 = vector.extract_strided_slice %161 {offsets = [0, 192], sizes = [8, 64], strides = [1, 1]} : vector<8x256xf32> to vector<8x64xf32>
    %172 = math.tanh %171 : vector<8x64xf32>
    %173 = arith.mulf %169, %152 : vector<8x64xf32>
    %174 = arith.mulf %168, %172 : vector<8x64xf32>
    %175 = arith.addf %173, %174 : vector<8x64xf32>
    %176 = math.tanh %175 : vector<8x64xf32>
    %177 = arith.mulf %170, %176 : vector<8x64xf32>
    %c7_i32 = arith.constant 7 : i32
    %c8_i32_52 = arith.constant 8 : i32
    %178 = arith.muli %c7_i32, %c8_i32_52 : i32
    %179 = tpu.assume_multiple %178, 8 : i32
    %180 = arith.index_cast %179 : i32 to index
    %c0_53 = arith.constant 0 : index
    %181 = vector.load %arg7[%180, %c0_53] : memref<64x256xf32, #tpu.memory_space<vmem>>, vector<8x256xf32>
    %c0_54 = arith.constant 0 : index
    %c0_55 = arith.constant 0 : index
    %182 = vector.load %arg2[%c0_54, %c0_55] : memref<64x256xf32, #tpu.memory_space<vmem>>, vector<64x256xf32>
    %cst_56 = arith.constant dense<0.000000e+00> : vector<8x256xf32>
    %183 = tpu.matmul %177, %182, %cst_56 {dimension_numbers = #tpu.dot_dimension_numbers<[1], [0], [0], [1], [0, 0, 1, 1], [], []>} : vector<8x64xf32>, vector<64x256xf32>, vector<8x256xf32> -> vector<8x256xf32>
    %184 = arith.addf %181, %183 : vector<8x256xf32>
    %185 = vector.extract_strided_slice %184 {offsets = [0, 0], sizes = [8, 192], strides = [1, 1]} : vector<8x256xf32> to vector<8x192xf32>
    %186 = arith.negf %185 : vector<8x192xf32>
    %187 = math.exp %186 : vector<8x192xf32>
    %cst_57 = arith.constant 1.000000e+00 : f32
    %188 = vector.broadcast %cst_57 : f32 to vector<8x192xf32>
    %189 = arith.addf %188, %187 : vector<8x192xf32>
    %190 = arith.divf %188, %189 : vector<8x192xf32>
    %191 = vector.extract_strided_slice %190 {offsets = [0, 0], sizes = [8, 64], strides = [1, 1]} : vector<8x192xf32> to vector<8x64xf32>
    %192 = vector.extract_strided_slice %190 {offsets = [0, 64], sizes = [8, 64], strides = [1, 1]} : vector<8x192xf32> to vector<8x64xf32>
    %193 = vector.extract_strided_slice %190 {offsets = [0, 128], sizes = [8, 64], strides = [1, 1]} : vector<8x192xf32> to vector<8x64xf32>
    %194 = vector.extract_strided_slice %184 {offsets = [0, 192], sizes = [8, 64], strides = [1, 1]} : vector<8x256xf32> to vector<8x64xf32>
    %195 = math.tanh %194 : vector<8x64xf32>
    %196 = arith.mulf %192, %175 : vector<8x64xf32>
    %197 = arith.mulf %191, %195 : vector<8x64xf32>
    %198 = arith.addf %196, %197 : vector<8x64xf32>
    %199 = math.tanh %198 : vector<8x64xf32>
    %200 = arith.mulf %193, %199 : vector<8x64xf32>
    %c8_i32_58 = arith.constant 8 : i32
    %c0_59 = arith.constant 0 : index
    %c0_60 = arith.constant 0 : index
    %201 = vector.load %arg4[%c0_59, %c0_60] : memref<1x64xf32, #tpu.memory_space<vmem>>, vector<1x64xf32>
    %202 = vector.broadcast %201 : vector<1x64xf32> to vector<8x64xf32>
    %203 = arith.mulf %200, %202 : vector<8x64xf32>
    %cst_61 = arith.constant dense<0.000000e+00> : vector<8xf32>
    %204 = vector.multi_reduction <add>, %203, %cst_61 [1] : vector<8x64xf32> to vector<8xf32>
    %205 = vector.shape_cast %204 : vector<8xf32> to vector<8x1xf32>
    %c0_62 = arith.constant 0 : index
    %c0_63 = arith.constant 0 : index
    %206 = vector.load %arg5[%c0_62, %c0_63] : memref<1x1xf32, #tpu.memory_space<vmem>>, vector<1x1xf32>
    %207 = vector.broadcast %206 : vector<1x1xf32> to vector<8x1xf32>
    %208 = arith.addf %205, %207 : vector<8x1xf32>
    %c0_64 = arith.constant 0 : index
    %c0_65 = arith.constant 0 : index
    %209 = vector.load %arg6[%c0_64, %c0_65] : memref<8x1xf32, #tpu.memory_space<vmem>>, vector<8x1xf32>
    tpu.vector_store %arg6[%c0_64, %c0_65], %208 {strides = array<i32>} : memref<8x1xf32, #tpu.memory_space<vmem>>, vector<8x1xf32>,
    return
  }
}

</mosaic_0001>

<llo_original>
// kernel: tpu_custom_call.1
$region0: #{tpu_custom_call.1}
  #allocation0 [shape = 'u32[]', space=smem, size = 0x4, offset = 0x4, fixed_abs, tag = 'smem constant byte address 0x4 - core index']
  #allocation1 [shape = 'u32[144,128]{1,0:T(1,128)}', space=vmem, size = 0x12000, scoped, tag = 'internal scratch']
  #allocation2 [shape = 'f32[64,256]{1,0:T(8,128)}', space=vmem, size = 0x10000, scoped, tag = 'scratch operand']
  #allocation3 [shape = 'f32[1,1]{1,0:T(1,128)S(1)}', space=vmem, size = 0x200, scoped, tag = 'scoped memory for tpu_custom_call.1']
  %s0 = inlined_call_operand.vmem [shape: f32[64,2], index: 0, kind: input, shape index: {}]
  %s1 = inlined_call_operand.vmem [shape: f32[2,256], index: 1, kind: input, shape index: {}]
  %s2 = inlined_call_operand.hbm [shape: f32[64,256], index: 2, kind: input, shape index: {}]
  %s3 = inlined_call_operand.vmem [shape: f32[1,256], index: 3, kind: input, shape index: {}]
  %s4 = inlined_call_operand.vmem [shape: f32[1,64], index: 4, kind: input, shape index: {}]
  %s5 = inlined_call_operand.<no memory space> [shape: f32[1,1], index: 5, kind: input, shape index: {}]
  %s6 = inlined_call_operand.vmem [shape: f32[8,1], index: 6, kind: output, shape index: {}]
  %s7 = sld [smem:[#allocation0]]
  $region38: #{tpu_custom_call.1} parent=0
    _
  %s9 = ssub.s32 1, %s7
  %s10 = scalar_select 0, %s9, %s7
  %v11 = vstv %s5
  %12 = vst [vmem:[#allocation3] sm:$0x1] %v11
  $region1: #{tpu_custom_call.1} parent=0
    #allocation4 [shape = 'u8[65536]{0}', space=vmem, size = 0x10000, scoped, tag = 'input window, operand 2, single buffered']
    #allocation5 [shape = 's32[1]{0}', space=sflag, size = 0x4, scoped, tag = 'scoped memory for tpu_custom_call.1']
    %13 = vsyncpa [#allocation5], 0
    // Predicated region
    $region2: #{tpu_custom_call.1} parent=1 // pred_check
      _
    $region3: #{tpu_custom_call.1} parent=1 // pred_check_branch
      %15 = sbr.rel (0) target = $region5
    $region4: #{tpu_custom_call.1} parent=1 // pred_region
      _
    $region5: #{tpu_custom_call.1} parent=1 // pred_fallthru
      _
    // Predicated region
    $region6: #{tpu_custom_call.1} parent=1 // pred_check
      _
    $region7: #{tpu_custom_call.1} parent=1 // pred_check_branch
      %17 = sbr.rel (0) target = $region9
    $region8: #{tpu_custom_call.1} parent=1 // pred_region
      _
    $region9: #{tpu_custom_call.1} parent=1 // pred_fallthru
      _
    // Predicated region
    $region10: #{tpu_custom_call.1} parent=1 // pred_check
      _
    $region11: #{tpu_custom_call.1} parent=1 // pred_check_branch
      %19 = sbr.rel (0) target = $region13
    $region12: #{tpu_custom_call.1} parent=1 // pred_region
      %s21 = ssub.s32 2048, 2048
      %22 = vsyncadd [#allocation5], %s21
      %s23 = sshll.u32 [#allocation4], 4
      %s24 = int_to_ptr.vmem [resolvable:$true] %s23
      %29 = dma.hbm_to_vmem [thread:$0]  %s2, 2048, %s24, [#allocation5], 256, 256, 16
    $region13: #{tpu_custom_call.1} parent=1 // pred_fallthru
      _
    // Predicated region
    $region14: #{tpu_custom_call.1} parent=1 // pred_check
      _
    $region15: #{tpu_custom_call.1} parent=1 // pred_check_branch
      %31 = sbr.rel (0) target = $region17
    $region16: #{tpu_custom_call.1} parent=1 // pred_region
      _
    $region17: #{tpu_custom_call.1} parent=1 // pred_fallthru
      _
    // Predicated region
    $region18: #{tpu_custom_call.1} parent=1 // pred_check
      _
    $region19: #{tpu_custom_call.1} parent=1 // pred_check_branch
      %33 = sbr.rel (0) target = $region21
    $region20: #{tpu_custom_call.1} parent=1 // pred_region
      _
    $region21: #{tpu_custom_call.1} parent=1 // pred_fallthru
      _
    // Predicated region
    $region22: #{tpu_custom_call.1} parent=1 // pred_check
      _
    $region23: #{tpu_custom_call.1} parent=1 // pred_check_branch
      %35 = sbr.rel (0) target = $region25
    $region24: #{tpu_custom_call.1} parent=1 // pred_region
      _
    $region25: #{tpu_custom_call.1} parent=1 // pred_fallthru
      _
    // Predicated region
    $region26: #{tpu_custom_call.1} parent=1 // pred_check
      _
    $region27: #{tpu_custom_call.1} parent=1 // pred_check_branch
      %37 = sbr.rel (0) target = $region29
    $region28: #{tpu_custom_call.1} parent=1 // pred_region
      %38 = dma.done [#allocation5], 2048
    $region29: #{tpu_custom_call.1} parent=1 // pred_fallthru
      _
    %v39 = vld [vmem:[%s0] sm:$0xff]
    %v40 = vld [vmem:[%s0 + $0x8] sm:$0xff]
    %v41 = vld [vmem:[%s0 + $0x10] sm:$0xff]
    %v42 = vld [vmem:[%s0 + $0x18] sm:$0xff]
    %v43 = vld [vmem:[%s0 + $0x20] sm:$0xff]
    %v44 = vld [vmem:[%s0 + $0x28] sm:$0xff]
    %v45 = vld [vmem:[%s0 + $0x30] sm:$0xff]
    %v46 = vld [vmem:[%s0 + $0x38] sm:$0xff]
    %v47 = vld [vmem:[%s1] ss:$2 sm:$0x3]
    %49 = vset.pattern.permute.xlu0 0
    %50 = vperm.xlu0 %49, %v39
    %v51 = vpop.permute.xlu0 %50
    %54 = vset.pattern.permute.xlu0 0
    %55 = vperm.xlu0 %54, %v40
    %v56 = vpop.permute.xlu0 %55
    %59 = vset.pattern.permute.xlu0 0
    %60 = vperm.xlu0 %59, %v41
    %v61 = vpop.permute.xlu0 %60
    %64 = vset.pattern.permute.xlu0 0
    %65 = vperm.xlu0 %64, %v42
    %v66 = vpop.permute.xlu0 %65
    %69 = vset.pattern.permute.xlu0 0
    %70 = vperm.xlu0 %69, %v43
    %v71 = vpop.permute.xlu0 %70
    %74 = vset.pattern.permute.xlu0 0
    %75 = vperm.xlu0 %74, %v44
    %v76 = vpop.permute.xlu0 %75
    %79 = vset.pattern.permute.xlu0 0
    %80 = vperm.xlu0 %79, %v45
    %v81 = vpop.permute.xlu0 %80
    %84 = vset.pattern.permute.xlu0 0
    %85 = vperm.xlu0 %84, %v46
    %v86 = vpop.permute.xlu0 %85
    %v89 = vlaneseq
    %v90 = vshrl.u32 %v89, 7
    %v91 = vsub.s32 0, %v90
    %v92 = vrot.slane %v47, %v91
    %v93 = vlaneseq
    %v94 = vshrl.u32 %v93, 7
    %v95 = vsub.s32 1, %v94
    %v96 = vrot.slane %v47, %v95
    %v99 = vmul.f32 %v51, %v92
    %v100 = vmul.f32 %v51, %v96
    %v101 = vmul.f32 %v56, %v92
    %v102 = vmul.f32 %v56, %v96
    %v103 = vmul.f32 %v61, %v92
    %v104 = vmul.f32 %v61, %v96
    %v105 = vmul.f32 %v66, %v92
    %v106 = vmul.f32 %v66, %v96
    %v107 = vmul.f32 %v71, %v92
    %v108 = vmul.f32 %v71, %v96
    %v109 = vmul.f32 %v76, %v92
    %v110 = vmul.f32 %v76, %v96
    %v111 = vmul.f32 %v81, %v92
    %v112 = vmul.f32 %v81, %v96
    %v113 = vmul.f32 %v86, %v92
    %v114 = vmul.f32 %v86, %v96
    %s115 = scalar_lea.vmem %s1, 1
    %v116 = vld [vmem:[%s115] ss:$2 sm:$0x3]
    %117 = vset.pattern.permute.xlu0 1
    %118 = vperm.xlu0 %117, %v39
    %v119 = vpop.permute.xlu0 %118
    %121 = vset.pattern.permute.xlu0 1
    %122 = vperm.xlu0 %121, %v40
    %v123 = vpop.permute.xlu0 %122
    %125 = vset.pattern.permute.xlu0 1
    %126 = vperm.xlu0 %125, %v41
    %v127 = vpop.permute.xlu0 %126
    %129 = vset.pattern.permute.xlu0 1
    %130 = vperm.xlu0 %129, %v42
    %v131 = vpop.permute.xlu0 %130
    %133 = vset.pattern.permute.xlu0 1
    %134 = vperm.xlu0 %133, %v43
    %v135 = vpop.permute.xlu0 %134
    %137 = vset.pattern.permute.xlu0 1
    %138 = vperm.xlu0 %137, %v44
    %v139 = vpop.permute.xlu0 %138
    %141 = vset.pattern.permute.xlu0 1
    %142 = vperm.xlu0 %141, %v45
    %v143 = vpop.permute.xlu0 %142
    %145 = vset.pattern.permute.xlu0 1
    %146 = vperm.xlu0 %145, %v46
    %v147 = vpop.permute.xlu0 %146
    %v150 = vlaneseq
    %v151 = vshrl.u32 %v150, 7
    %v152 = vsub.s32 0, %v151
    %v153 = vrot.slane %v116, %v152
    %v154 = vlaneseq
    %v155 = vshrl.u32 %v154, 7
    %v156 = vsub.s32 1, %v155
    %v157 = vrot.slane %v116, %v156
    %v160 = vmul.f32 %v119, %v153
    %v161 = vmul.f32 %v119, %v157
    %v162 = vmul.f32 %v123, %v153
    %v163 = vmul.f32 %v123, %v157
    %v164 = vmul.f32 %v127, %v153
    %v165 = vmul.f32 %v127, %v157
    %v166 = vmul.f32 %v131, %v153
    %v167 = vmul.f32 %v131, %v157
    %v168 = vmul.f32 %v135, %v153
    %v169 = vmul.f32 %v135, %v157
    %v170 = vmul.f32 %v139, %v153
    %v171 = vmul.f32 %v139, %v157
    %v172 = vmul.f32 %v143, %v153
    %v173 = vmul.f32 %v143, %v157
    %v174 = vmul.f32 %v147, %v153
    %v175 = vmul.f32 %v147, %v157
    %v176 = vadd.f32 %v99, %v160
    %v177 = vadd.f32 %v100, %v161
    %v178 = vadd.f32 %v101, %v162
    %v179 = vadd.f32 %v102, %v163
    %v180 = vadd.f32 %v103, %v164
    %v181 = vadd.f32 %v104, %v165
    %v182 = vadd.f32 %v105, %v166
    %v183 = vadd.f32 %v106, %v167
    %v184 = vadd.f32 %v107, %v168
    %v185 = vadd.f32 %v108, %v169
    %v186 = vadd.f32 %v109, %v170
    %v187 = vadd.f32 %v110, %v171
    %v188 = vadd.f32 %v111, %v172
    %v189 = vadd.f32 %v112, %v173
    %v190 = vadd.f32 %v113, %v174
    %v191 = vadd.f32 %v114, %v175
    %v192 = vld [vmem:[%s3] sm:$0x3]
    %v194 = vlaneseq
    %v195 = vshrl.u32 %v194, 7
    %v196 = vsub.s32 0, %v195
    %v197 = vrot.slane %v192, %v196
    %v198 = vlaneseq
    %v199 = vshrl.u32 %v198, 7
    %v200 = vsub.s32 1, %v199
    %v201 = vrot.slane %v192, %v200
    %v204 = vadd.f32 %v176, %v197
    %v205 = vadd.f32 %v177, %v201
    %v206 = vadd.f32 %v178, %v197
    %v207 = vadd.f32 %v179, %v201
    %v208 = vadd.f32 %v180, %v197
    %v209 = vadd.f32 %v181, %v201
    %v210 = vadd.f32 %v182, %v197
    %v211 = vadd.f32 %v183, %v201
    %v212 = vadd.f32 %v184, %v197
    %v213 = vadd.f32 %v185, %v201
    %v214 = vadd.f32 %v186, %v197
    %v215 = vadd.f32 %v187, %v201
    %v216 = vadd.f32 %v188, %v197
    %v217 = vadd.f32 %v189, %v201
    %v218 = vadd.f32 %v190, %v197
    %v219 = vadd.f32 %v191, %v201
    %220 = vst [vmem:[#allocation2] sm:$0xff] %v204
    %221 = vst [vmem:[#allocation2 + $0x8] sm:$0xff] %v205
    %222 = vst [vmem:[#allocation2 + $0x10] sm:$0xff] %v206
    %223 = vst [vmem:[#allocation2 + $0x18] sm:$0xff] %v207
    %224 = vst [vmem:[#allocation2 + $0x20] sm:$0xff] %v208
    %225 = vst [vmem:[#allocation2 + $0x28] sm:$0xff] %v209
    %226 = vst [vmem:[#allocation2 + $0x30] sm:$0xff] %v210
    %227 = vst [vmem:[#allocation2 + $0x38] sm:$0xff] %v211
    %228 = vst [vmem:[#allocation2 + $0x40] sm:$0xff] %v212
    %229 = vst [vmem:[#allocation2 + $0x48] sm:$0xff] %v213
    %230 = vst [vmem:[#allocation2 + $0x50] sm:$0xff] %v214
    %231 = vst [vmem:[#allocation2 + $0x58] sm:$0xff] %v215
    %232 = vst [vmem:[#allocation2 + $0x60] sm:$0xff] %v216
    %233 = vst [vmem:[#allocation2 + $0x68] sm:$0xff] %v217
    %234 = vst [vmem:[#allocation2 + $0x70] sm:$0xff] %v218
    %235 = vst [vmem:[#allocation2 + $0x78] sm:$0xff] %v219
    %s236 = smul.u32 0, 2
    %s237 = smul.addr %s236, 8
    %s238 = scalar_lea.vmem [#allocation2], %s237
    %v239 = vld [vmem:[%s238] sm:$0xff]
    %v240 = vld [vmem:[%s238 + $0x8] sm:$0xff]
    %v241 = vld [vmem:[#allocation4] sm:$0xff]
    %v242 = vld [vmem:[#allocation4 + $0x8] sm:$0xff]
    %v243 = vld [vmem:[#allocation4 + $0x10] sm:$0xff]
    %v244 = vld [vmem:[#allocation4 + $0x18] sm:$0xff]
    %v245 = vld [vmem:[#allocation4 + $0x20] sm:$0xff]
    %v246 = vld [vmem:[#allocation4 + $0x28] sm:$0xff]
    %v247 = vld [vmem:[#allocation4 + $0x30] sm:$0xff]
    %v248 = vld [vmem:[#allocation4 + $0x38] sm:$0xff]
    %v249 = vld [vmem:[#allocation4 + $0x40] sm:$0xff]
    %v250 = vld [vmem:[#allocation4 + $0x48] sm:$0xff]
    %v251 = vld [vmem:[#allocation4 + $0x50] sm:$0xff]
    %v252 = vld [vmem:[#allocation4 + $0x58] sm:$0xff]
    %v253 = vld [vmem:[#allocation4 + $0x60] sm:$0xff]
    %v254 = vld [vmem:[#allocation4 + $0x68] sm:$0xff]
    %v255 = vld [vmem:[#allocation4 + $0x70] sm:$0xff]
    %v256 = vld [vmem:[#allocation4 + $0x78] sm:$0xff]
    %vm257 = vcmask 523264
    %v259 = vsel %vm257, 0.0, 0
    %261 = vmatprep.subr.mxu0 0.0
    %262 = vmatpush1.msra.mxu0 0.0
    %263 = vmatprep.subr.mxu0 0.0
    %264 = vmatpush1.msra.mxu0 0.0
    %265 = vmatprep.subr.mxu0 0.0
    %266 = vmatpush1.msra.mxu0 0.0
    %267 = vmatprep.subr.mxu0 0.0
    %268 = vmatpush1.msra.mxu0 0.0
    %269 = vmatprep.subr.mxu0 0.0
    %270 = vmatpush1.msra.mxu0 0.0
    %271 = vmatprep.subr.mxu0 0.0
    %272 = vmatpush1.msra.mxu0 0.0
    %273 = vmatprep.subr.mxu0 0.0
    %274 = vmatpush1.msra.mxu0 0.0
    %275 = vmatprep.subr.mxu0 0.0
    %276 = vmatpush1.msra.mxu0 0.0
    %277 = vmatprep.subr.mxu0 %v256
    %278 = vmatpush1.msra.mxu0 %v255
    %279 = vmatprep.subr.mxu0 %v254
    %280 = vmatpush1.msra.mxu0 %v253
    %281 = vmatprep.subr.mxu0 %v252
    %282 = vmatpush1.msra.mxu0 %v251
    %283 = vmatprep.subr.mxu0 %v250
    %284 = vmatpush1.msra.mxu0 %v249
    %285 = vmatprep.subr.mxu0 %v248
    %286 = vmatpush1.msra.mxu0 %v247
    %287 = vmatprep.subr.mxu0 %v246
    %288 = vmatpush1.msra.mxu0 %v245
    %289 = vmatprep.subr.mxu0 %v244
    %290 = vmatpush1.msra.mxu0 %v243
    %291 = vmatprep.subr.mxu0 %v242
    %292 = vmatpush1.msra.mxu0 %v241
    %293 = vmatprep.subr.mxu0 0.0
    %294 = vmatpush2.msra.mxu0 0.0
    %295 = vmatprep.subr.mxu0 0.0
    %296 = vmatpush2.msra.mxu0 0.0
    %297 = vmatprep.subr.mxu0 0.0
    %298 = vmatpush2.msra.mxu0 0.0
    %299 = vmatprep.subr.mxu0 0.0
    %300 = vmatpush2.msra.mxu0 0.0
    %301 = vmatprep.subr.mxu0 0.0
    %302 = vmatpush2.msra.mxu0 0.0
    %303 = vmatprep.subr.mxu0 0.0
    %304 = vmatpush2.msra.mxu0 0.0
    %305 = vmatprep.subr.mxu0 0.0
    %306 = vmatpush2.msra.mxu0 0.0
    %307 = vmatprep.subr.mxu0 0.0
    %308 = vmatpush2.msra.mxu0 0.0
    %309 = vmatprep.subr.mxu0 0.0
    %310 = vmatpush2.msra.mxu0 0.0
    %311 = vmatprep.subr.mxu0 0.0
    %312 = vmatpush2.msra.mxu0 0.0
    %313 = vmatprep.subr.mxu0 0.0
    %314 = vmatpush2.msra.mxu0 0.0
    %315 = vmatprep.subr.mxu0 0.0
    %316 = vmatpush2.msra.mxu0 0.0
    %317 = vmatprep.subr.mxu0 0.0
    %318 = vmatpush2.msra.mxu0 0.0
    %319 = vmatprep.subr.mxu0 0.0
    %320 = vmatpush2.msra.mxu0 0.0
    %321 = vmatprep.subr.mxu0 0.0
    %322 = vmatpush2.msra.mxu0 0.0
    %323 = vmatprep.subr.mxu0 0.0
    %324 = vmatpush2.msra.mxu0 0.0
    %325 = vmatprep.mubr.f32.mxu0 0.0
    %326 = vmatmul.mubr.f32.gmra.mxu0 %v259
    %v327 = vpop.f32.mrf.mxu0
    %v328 = vadd.f32 0.0, %v327
    %v329 = vpop.f32.mrf.mxu0
    %v330 = vadd.f32 0.0, %v329
    %331 = vdwg.mxu0
    %v332 = vadd.f32 %v239, %v328
    %v333 = vadd.f32 %v240, %v330
    %v334 = vxor.u32 %v332, 2147483648
    %v335 = vxor.u32 %v333, 2147483648
    %v336 = vmul.f32 %v334, 1.442695
    %v337 = vpow.pop %v336
    %v338 = vmul.f32 %v335, 1.442695
    %v339 = vpow.pop %v338
    %v340 = vadd.f32 %v337, 1.0
    %v341 = vadd.f32 %v339, 1.0
    %v342 = vrcp.pop %v340
    %v343 = vmul.f32 1.0, %v342
    %v344 = vrcp.pop %v341
    %v345 = vmul.f32 1.0, %v344
    %v346 = vtanh.pop %v333
    %v347 = vmul.f32 %v343, 0.0
    %349 = vrot.lane.b32.xlu0 %v346, 64
    %v350 = vpop.permute.xlu0 %349
    %v352 = vmul.f32 %v343, %v350
    %354 = vrot.lane.b32.xlu0 %v352, 64
    %v355 = vpop.permute.xlu0 %354
    %v357 = vadd.f32 %v347, %v355
    %v358 = vtanh.pop %v357
    %360 = vrot.lane.b32.xlu0 %v358, 64
    %v361 = vpop.permute.xlu0 %360
    %v363 = vmul.f32 %v345, %v361
    %s364 = smul.u32 1, 2
    %s365 = smul.addr %s364, 8
    %s366 = scalar_lea.vmem [#allocation2], %s365
    %v367 = vld [vmem:[%s366] sm:$0xff]
    %v368 = vld [vmem:[%s366 + $0x8] sm:$0xff]
    %v370 = vsel %vm257, %v363, 0
    %372 = vmatprep.subr.mxu0 0.0
    %373 = vmatpush1.msra.mxu0 0.0
    %374 = vmatprep.subr.mxu0 0.0
    %375 = vmatpush1.msra.mxu0 0.0
    %376 = vmatprep.subr.mxu0 0.0
    %377 = vmatpush1.msra.mxu0 0.0
    %378 = vmatprep.subr.mxu0 0.0
    %379 = vmatpush1.msra.mxu0 0.0
    %380 = vmatprep.subr.mxu0 0.0
    %381 = vmatpush1.msra.mxu0 0.0
    %382 = vmatprep.subr.mxu0 0.0
    %383 = vmatpush1.msra.mxu0 0.0
    %384 = vmatprep.subr.mxu0 0.0
    %385 = vmatpush1.msra.mxu0 0.0
    %386 = vmatprep.subr.mxu0 0.0
    %387 = vmatpush1.msra.mxu0 0.0
    %388 = vmatprep.subr.mxu0 %v256
    %389 = vmatpush1.msra.mxu0 %v255
    %390 = vmatprep.subr.mxu0 %v254
    %391 = vmatpush1.msra.mxu0 %v253
    %392 = vmatprep.subr.mxu0 %v252
    %393 = vmatpush1.msra.mxu0 %v251
    %394 = vmatprep.subr.mxu0 %v250
    %395 = vmatpush1.msra.mxu0 %v249
    %396 = vmatprep.subr.mxu0 %v248
    %397 = vmatpush1.msra.mxu0 %v247
    %398 = vmatprep.subr.mxu0 %v246
    %399 = vmatpush1.msra.mxu0 %v245
    %400 = vmatprep.subr.mxu0 %v244
    %401 = vmatpush1.msra.mxu0 %v243
    %402 = vmatprep.subr.mxu0 %v242
    %403 = vmatpush1.msra.mxu0 %v241
    %404 = vmatprep.subr.mxu0 0.0
    %405 = vmatpush2.msra.mxu0 0.0
    %406 = vmatprep.subr.mxu0 0.0
    %407 = vmatpush2.msra.mxu0 0.0
    %408 = vmatprep.subr.mxu0 0.0
    %409 = vmatpush2.msra.mxu0 0.0
    %410 = vmatprep.subr.mxu0 0.0
    %411 = vmatpush2.msra.mxu0 0.0
    %412 = vmatprep.subr.mxu0 0.0
    %413 = vmatpush2.msra.mxu0 0.0
    %414 = vmatprep.subr.mxu0 0.0
    %415 = vmatpush2.msra.mxu0 0.0
    %416 = vmatprep.subr.mxu0 0.0
    %417 = vmatpush2.msra.mxu0 0.0
    %418 = vmatprep.subr.mxu0 0.0
    %419 = vmatpush2.msra.mxu0 0.0
    %420 = vmatprep.subr.mxu0 0.0
    %421 = vmatpush2.msra.mxu0 0.0
    %422 = vmatprep.subr.mxu0 0.0
    %423 = vmatpush2.msra.mxu0 0.0
    %424 = vmatprep.subr.mxu0 0.0
    %425 = vmatpush2.msra.mxu0 0.0
    %426 = vmatprep.subr.mxu0 0.0
    %427 = vmatpush2.msra.mxu0 0.0
    %428 = vmatprep.subr.mxu0 0.0
    %429 = vmatpush2.msra.mxu0 0.0
    %430 = vmatprep.subr.mxu0 0.0
    %431 = vmatpush2.msra.mxu0 0.0
    %432 = vmatprep.subr.mxu0 0.0
    %433 = vmatpush2.msra.mxu0 0.0
    %434 = vmatprep.subr.mxu0 0.0
    %435 = vmatpush2.msra.mxu0 0.0
    %436 = vmatprep.mubr.f32.mxu0 0.0
    %437 = vmatmul.mubr.f32.gmra.mxu0 %v370
    %v438 = vpop.f32.mrf.mxu0
    %v439 = vadd.f32 0.0, %v438
    %v440 = vpop.f32.mrf.mxu0
    %v441 = vadd.f32 0.0, %v440
    %442 = vdwg.mxu0
    %v443 = vadd.f32 %v367, %v439
    %v444 = vadd.f32 %v368, %v441
    %v445 = vxor.u32 %v443, 2147483648
    %v446 = vxor.u32 %v444, 2147483648
    %v447 = vmul.f32 %v445, 1.442695
    %v448 = vpow.pop %v447
    %v449 = vmul.f32 %v446, 1.442695
    %v450 = vpow.pop %v449
    %v451 = vadd.f32 %v448, 1.0
    %v452 = vadd.f32 %v450, 1.0
    %v453 = vrcp.pop %v451
    %v454 = vmul.f32 1.0, %v453
    %v455 = vrcp.pop %v452
    %v456 = vmul.f32 1.0, %v455
    %v457 = vtanh.pop %v444
    %v458 = vmul.f32 %v454, %v357
    %460 = vrot.lane.b32.xlu0 %v457, 64
    %v461 = vpop.permute.xlu0 %460
    %v463 = vmul.f32 %v454, %v461
    %465 = vrot.lane.b32.xlu0 %v463, 64
    %v466 = vpop.permute.xlu0 %465
    %v468 = vadd.f32 %v458, %v466
    %v469 = vtanh.pop %v468
    %471 = vrot.lane.b32.xlu0 %v469, 64
    %v472 = vpop.permute.xlu0 %471
    %v474 = vmul.f32 %v456, %v472
    %s475 = smul.u32 2, 2
    %s476 = smul.addr %s475, 8
    %s477 = scalar_lea.vmem [#allocation2], %s476
    %v478 = vld [vmem:[%s477] sm:$0xff]
    %v479 = vld [vmem:[%s477 + $0x8] sm:$0xff]
    %v481 = vsel %vm257, %v474, 0
    %483 = vmatprep.subr.mxu0 0.0
    %484 = vmatpush1.msra.mxu0 0.0
    %485 = vmatprep.subr.mxu0 0.0
    %486 = vmatpush1.msra.mxu0 0.0
    %487 = vmatprep.subr.mxu0 0.0
    %488 = vmatpush1.msra.mxu0 0.0
    %489 = vmatprep.subr.mxu0 0.0
    %490 = vmatpush1.msra.mxu0 0.0
    %491 = vmatprep.subr.mxu0 0.0
    %492 = vmatpush1.msra.mxu0 0.0
    %493 = vmatprep.subr.mxu0 0.0
    %494 = vmatpush1.msra.mxu0 0.0
    %495 = vmatprep.subr.mxu0 0.0
    %496 = vmatpush1.msra.mxu0 0.0
    %497 = vmatprep.subr.mxu0 0.0
    %498 = vmatpush1.msra.mxu0 0.0
    %499 = vmatprep.subr.mxu0 %v256
    %500 = vmatpush1.msra.mxu0 %v255
    %501 = vmatprep.subr.mxu0 %v254
    %502 = vmatpush1.msra.mxu0 %v253
    %503 = vmatprep.subr.mxu0 %v252
    %504 = vmatpush1.msra.mxu0 %v251
    %505 = vmatprep.subr.mxu0 %v250
    %506 = vmatpush1.msra.mxu0 %v249
    %507 = vmatprep.subr.mxu0 %v248
    %508 = vmatpush1.msra.mxu0 %v247
    %509 = vmatprep.subr.mxu0 %v246
    %510 = vmatpush1.msra.mxu0 %v245
    %511 = vmatprep.subr.mxu0 %v244
    %512 = vmatpush1.msra.mxu0 %v243
    %513 = vmatprep.subr.mxu0 %v242
    %514 = vmatpush1.msra.mxu0 %v241
    %515 = vmatprep.subr.mxu0 0.0
    %516 = vmatpush2.msra.mxu0 0.0
    %517 = vmatprep.subr.mxu0 0.0
    %518 = vmatpush2.msra.mxu0 0.0
    %519 = vmatprep.subr.mxu0 0.0
    %520 = vmatpush2.msra.mxu0 0.0
    %521 = vmatprep.subr.mxu0 0.0
    %522 = vmatpush2.msra.mxu0 0.0
    %523 = vmatprep.subr.mxu0 0.0
    %524 = vmatpush2.msra.mxu0 0.0
    %525 = vmatprep.subr.mxu0 0.0
    %526 = vmatpush2.msra.mxu0 0.0
    %527 = vmatprep.subr.mxu0 0.0
    %528 = vmatpush2.msra.mxu0 0.0
    %529 = vmatprep.subr.mxu0 0.0
    %530 = vmatpush2.msra.mxu0 0.0
    %531 = vmatprep.subr.mxu0 0.0
    %532 = vmatpush2.msra.mxu0 0.0
    %533 = vmatprep.subr.mxu0 0.0
    %534 = vmatpush2.msra.mxu0 0.0
    %535 = vmatprep.subr.mxu0 0.0
    %536 = vmatpush2.msra.mxu0 0.0
    %537 = vmatprep.subr.mxu0 0.0
    %538 = vmatpush2.msra.mxu0 0.0
    %539 = vmatprep.subr.mxu0 0.0
    %540 = vmatpush2.msra.mxu0 0.0
    %541 = vmatprep.subr.mxu0 0.0
    %542 = vmatpush2.msra.mxu0 0.0
    %543 = vmatprep.subr.mxu0 0.0
    %544 = vmatpush2.msra.mxu0 0.0
    %545 = vmatprep.subr.mxu0 0.0
    %546 = vmatpush2.msra.mxu0 0.0
    %547 = vmatprep.mubr.f32.mxu0 0.0
    %548 = vmatmul.mubr.f32.gmra.mxu0 %v481
    %v549 = vpop.f32.mrf.mxu0
    %v550 = vadd.f32 0.0, %v549
    %v551 = vpop.f32.mrf.mxu0
    %v552 = vadd.f32 0.0, %v551
    %553 = vdwg.mxu0
    %v554 = vadd.f32 %v478, %v550
    %v555 = vadd.f32 %v479, %v552
    %v556 = vxor.u32 %v554, 2147483648
    %v557 = vxor.u32 %v555, 2147483648
    %v558 = vmul.f32 %v556, 1.442695
    %v559 = vpow.pop %v558
    %v560 = vmul.f32 %v557, 1.442695
    %v561 = vpow.pop %v560
    %v562 = vadd.f32 %v559, 1.0
    %v563 = vadd.f32 %v561, 1.0
    %v564 = vrcp.pop %v562
    %v565 = vmul.f32 1.0, %v564
    %v566 = vrcp.pop %v563
    %v567 = vmul.f32 1.0, %v566
    %v568 = vtanh.pop %v555
    %v569 = vmul.f32 %v565, %v468
    %571 = vrot.lane.b32.xlu0 %v568, 64
    %v572 = vpop.permute.xlu0 %571
    %v574 = vmul.f32 %v565, %v572
    %576 = vrot.lane.b32.xlu0 %v574, 64
    %v577 = vpop.permute.xlu0 %576
    %v579 = vadd.f32 %v569, %v577
    %v580 = vtanh.pop %v579
    %582 = vrot.lane.b32.xlu0 %v580, 64
    %v583 = vpop.permute.xlu0 %582
    %v585 = vmul.f32 %v567, %v583
    %s586 = smul.u32 3, 2
    %s587 = smul.addr %s586, 8
    %s588 = scalar_lea.vmem [#allocation2], %s587
    %v589 = vld [vmem:[%s588] sm:$0xff]
    %v590 = vld [vmem:[%s588 + $0x8] sm:$0xff]
    %v592 = vsel %vm257, %v585, 0
    %594 = vmatprep.subr.mxu0 0.0
    %595 = vmatpush1.msra.mxu0 0.0
    %596 = vmatprep.subr.mxu0 0.0
    %597 = vmatpush1.msra.mxu0 0.0
    %598 = vmatprep.subr.mxu0 0.0
    %599 = vmatpush1.msra.mxu0 0.0
    %600 = vmatprep.subr.mxu0 0.0
    %601 = vmatpush1.msra.mxu0 0.0
    %602 = vmatprep.subr.mxu0 0.0
    %603 = vmatpush1.msra.mxu0 0.0
    %604 = vmatprep.subr.mxu0 0.0
    %605 = vmatpush1.msra.mxu0 0.0
    %606 = vmatprep.subr.mxu0 0.0
    %607 = vmatpush1.msra.mxu0 0.0
    %608 = vmatprep.subr.mxu0 0.0
    %609 = vmatpush1.msra.mxu0 0.0
    %610 = vmatprep.subr.mxu0 %v256
    %611 = vmatpush1.msra.mxu0 %v255
    %612 = vmatprep.subr.mxu0 %v254
    %613 = vmatpush1.msra.mxu0 %v253
    %614 = vmatprep.subr.mxu0 %v252
    %615 = vmatpush1.msra.mxu0 %v251
    %616 = vmatprep.subr.mxu0 %v250
    %617 = vmatpush1.msra.mxu0 %v249
    %618 = vmatprep.subr.mxu0 %v248
    %619 = vmatpush1.msra.mxu0 %v247
    %620 = vmatprep.subr.mxu0 %v246
    %621 = vmatpush1.msra.mxu0 %v245
    %622 = vmatprep.subr.mxu0 %v244
    %623 = vmatpush1.msra.mxu0 %v243
    %624 = vmatprep.subr.mxu0 %v242
    %625 = vmatpush1.msra.mxu0 %v241
    %626 = vmatprep.subr.mxu0 0.0
    %627 = vmatpush2.msra.mxu0 0.0
    %628 = vmatprep.subr.mxu0 0.0
    %629 = vmatpush2.msra.mxu0 0.0
    %630 = vmatprep.subr.mxu0 0.0
    %631 = vmatpush2.msra.mxu0 0.0
    %632 = vmatprep.subr.mxu0 0.0
    %633 = vmatpush2.msra.mxu0 0.0
    %634 = vmatprep.subr.mxu0 0.0
    %635 = vmatpush2.msra.mxu0 0.0
    %636 = vmatprep.subr.mxu0 0.0
    %637 = vmatpush2.msra.mxu0 0.0
    %638 = vmatprep.subr.mxu0 0.0
    %639 = vmatpush2.msra.mxu0 0.0
    %640 = vmatprep.subr.mxu0 0.0
    %641 = vmatpush2.msra.mxu0 0.0
    %642 = vmatprep.subr.mxu0 0.0
    %643 = vmatpush2.msra.mxu0 0.0
    %644 = vmatprep.subr.mxu0 0.0
    %645 = vmatpush2.msra.mxu0 0.0
    %646 = vmatprep.subr.mxu0 0.0
    %647 = vmatpush2.msra.mxu0 0.0
    %648 = vmatprep.subr.mxu0 0.0
    %649 = vmatpush2.msra.mxu0 0.0
    %650 = vmatprep.subr.mxu0 0.0
    %651 = vmatpush2.msra.mxu0 0.0
    %652 = vmatprep.subr.mxu0 0.0
    %653 = vmatpush2.msra.mxu0 0.0
    %654 = vmatprep.subr.mxu0 0.0
    %655 = vmatpush2.msra.mxu0 0.0
    %656 = vmatprep.subr.mxu0 0.0
    %657 = vmatpush2.msra.mxu0 0.0
    %658 = vmatprep.mubr.f32.mxu0 0.0
    %659 = vmatmul.mubr.f32.gmra.mxu0 %v592
    %v660 = vpop.f32.mrf.mxu0
    %v661 = vadd.f32 0.0, %v660
    %v662 = vpop.f32.mrf.mxu0
    %v663 = vadd.f32 0.0, %v662
    %664 = vdwg.mxu0
    %v665 = vadd.f32 %v589, %v661
    %v666 = vadd.f32 %v590, %v663
    %v667 = vxor.u32 %v665, 2147483648
    %v668 = vxor.u32 %v666, 2147483648
    %v669 = vmul.f32 %v667, 1.442695
    %v670 = vpow.pop %v669
    %v671 = vmul.f32 %v668, 1.442695
    %v672 = vpow.pop %v671
    %v673 = vadd.f32 %v670, 1.0
    %v674 = vadd.f32 %v672, 1.0
    %v675 = vrcp.pop %v673
    %v676 = vmul.f32 1.0, %v675
    %v677 = vrcp.pop %v674
    %v678 = vmul.f32 1.0, %v677
    %v679 = vtanh.pop %v666
    %v680 = vmul.f32 %v676, %v579
    %682 = vrot.lane.b32.xlu0 %v679, 64
    %v683 = vpop.permute.xlu0 %682
    %v685 = vmul.f32 %v676, %v683
    %687 = vrot.lane.b32.xlu0 %v685, 64
    %v688 = vpop.permute.xlu0 %687
    %v690 = vadd.f32 %v680, %v688
    %v691 = vtanh.pop %v690
    %693 = vrot.lane.b32.xlu0 %v691, 64
    %v694 = vpop.permute.xlu0 %693
    %v696 = vmul.f32 %v678, %v694
    %s697 = smul.u32 4, 2
    %s698 = smul.addr %s697, 8
    %s699 = scalar_lea.vmem [#allocation2], %s698
    %v700 = vld [vmem:[%s699] sm:$0xff]
    %v701 = vld [vmem:[%s699 + $0x8] sm:$0xff]
    %v703 = vsel %vm257, %v696, 0
    %705 = vmatprep.subr.mxu0 0.0
    %706 = vmatpush1.msra.mxu0 0.0
    %707 = vmatprep.subr.mxu0 0.0
    %708 = vmatpush1.msra.mxu0 0.0
    %709 = vmatprep.subr.mxu0 0.0
    %710 = vmatpush1.msra.mxu0 0.0
    %711 = vmatprep.subr.mxu0 0.0
    %712 = vmatpush1.msra.mxu0 0.0
    %713 = vmatprep.subr.mxu0 0.0
    %714 = vmatpush1.msra.mxu0 0.0
    %715 = vmatprep.subr.mxu0 0.0
    %716 = vmatpush1.msra.mxu0 0.0
    %717 = vmatprep.subr.mxu0 0.0
    %718 = vmatpush1.msra.mxu0 0.0
    %719 = vmatprep.subr.mxu0 0.0
    %720 = vmatpush1.msra.mxu0 0.0
    %721 = vmatprep.subr.mxu0 %v256
    %722 = vmatpush1.msra.mxu0 %v255
    %723 = vmatprep.subr.mxu0 %v254
    %724 = vmatpush1.msra.mxu0 %v253
    %725 = vmatprep.subr.mxu0 %v252
    %726 = vmatpush1.msra.mxu0 %v251
    %727 = vmatprep.subr.mxu0 %v250
    %728 = vmatpush1.msra.mxu0 %v249
    %729 = vmatprep.subr.mxu0 %v248
    %730 = vmatpush1.msra.mxu0 %v247
    %731 = vmatprep.subr.mxu0 %v246
    %732 = vmatpush1.msra.mxu0 %v245
    %733 = vmatprep.subr.mxu0 %v244
    %734 = vmatpush1.msra.mxu0 %v243
    %735 = vmatprep.subr.mxu0 %v242
    %736 = vmatpush1.msra.mxu0 %v241
    %737 = vmatprep.subr.mxu0 0.0
    %738 = vmatpush2.msra.mxu0 0.0
    %739 = vmatprep.subr.mxu0 0.0
    %740 = vmatpush2.msra.mxu0 0.0
    %741 = vmatprep.subr.mxu0 0.0
    %742 = vmatpush2.msra.mxu0 0.0
    %743 = vmatprep.subr.mxu0 0.0
    %744 = vmatpush2.msra.mxu0 0.0
    %745 = vmatprep.subr.mxu0 0.0
    %746 = vmatpush2.msra.mxu0 0.0
    %747 = vmatprep.subr.mxu0 0.0
    %748 = vmatpush2.msra.mxu0 0.0
    %749 = vmatprep.subr.mxu0 0.0
    %750 = vmatpush2.msra.mxu0 0.0
    %751 = vmatprep.subr.mxu0 0.0
    %752 = vmatpush2.msra.mxu0 0.0
    %753 = vmatprep.subr.mxu0 0.0
    %754 = vmatpush2.msra.mxu0 0.0
    %755 = vmatprep.subr.mxu0 0.0
    %756 = vmatpush2.msra.mxu0 0.0
    %757 = vmatprep.subr.mxu0 0.0
    %758 = vmatpush2.msra.mxu0 0.0
    %759 = vmatprep.subr.mxu0 0.0
    %760 = vmatpush2.msra.mxu0 0.0
    %761 = vmatprep.subr.mxu0 0.0
    %762 = vmatpush2.msra.mxu0 0.0
    %763 = vmatprep.subr.mxu0 0.0
    %764 = vmatpush2.msra.mxu0 0.0
    %765 = vmatprep.subr.mxu0 0.0
    %766 = vmatpush2.msra.mxu0 0.0
    %767 = vmatprep.subr.mxu0 0.0
    %768 = vmatpush2.msra.mxu0 0.0
    %769 = vmatprep.mubr.f32.mxu0 0.0
    %770 = vmatmul.mubr.f32.gmra.mxu0 %v703
    %v771 = vpop.f32.mrf.mxu0
    %v772 = vadd.f32 0.0, %v771
    %v773 = vpop.f32.mrf.mxu0
    %v774 = vadd.f32 0.0, %v773
    %775 = vdwg.mxu0
    %v776 = vadd.f32 %v700, %v772
    %v777 = vadd.f32 %v701, %v774
    %v778 = vxor.u32 %v776, 2147483648
    %v779 = vxor.u32 %v777, 2147483648
    %v780 = vmul.f32 %v778, 1.442695
    %v781 = vpow.pop %v780
    %v782 = vmul.f32 %v779, 1.442695
    %v783 = vpow.pop %v782
    %v784 = vadd.f32 %v781, 1.0
    %v785 = vadd.f32 %v783, 1.0
    %v786 = vrcp.pop %v784
    %v787 = vmul.f32 1.0, %v786
    %v788 = vrcp.pop %v785
    %v789 = vmul.f32 1.0, %v788
    %v790 = vtanh.pop %v777
    %v791 = vmul.f32 %v787, %v690
    %793 = vrot.lane.b32.xlu0 %v790, 64
    %v794 = vpop.permute.xlu0 %793
    %v796 = vmul.f32 %v787, %v794
    %798 = vrot.lane.b32.xlu0 %v796, 64
    %v799 = vpop.permute.xlu0 %798
    %v801 = vadd.f32 %v791, %v799
    %v802 = vtanh.pop %v801
    %804 = vrot.lane.b32.xlu0 %v802, 64
    %v805 = vpop.permute.xlu0 %804
    %v807 = vmul.f32 %v789, %v805
    %s808 = smul.u32 5, 2
    %s809 = smul.addr %s808, 8
    %s810 = scalar_lea.vmem [#allocation2], %s809
    %v811 = vld [vmem:[%s810] sm:$0xff]
    %v812 = vld [vmem:[%s810 + $0x8] sm:$0xff]
    %v814 = vsel %vm257, %v807, 0
    %816 = vmatprep.subr.mxu0 0.0
    %817 = vmatpush1.msra.mxu0 0.0
    %818 = vmatprep.subr.mxu0 0.0
    %819 = vmatpush1.msra.mxu0 0.0
    %820 = vmatprep.subr.mxu0 0.0
    %821 = vmatpush1.msra.mxu0 0.0
    %822 = vmatprep.subr.mxu0 0.0
    %823 = vmatpush1.msra.mxu0 0.0
    %824 = vmatprep.subr.mxu0 0.0
    %825 = vmatpush1.msra.mxu0 0.0
    %826 = vmatprep.subr.mxu0 0.0
    %827 = vmatpush1.msra.mxu0 0.0
    %828 = vmatprep.subr.mxu0 0.0
    %829 = vmatpush1.msra.mxu0 0.0
    %830 = vmatprep.subr.mxu0 0.0
    %831 = vmatpush1.msra.mxu0 0.0
    %832 = vmatprep.subr.mxu0 %v256
    %833 = vmatpush1.msra.mxu0 %v255
    %834 = vmatprep.subr.mxu0 %v254
    %835 = vmatpush1.msra.mxu0 %v253
    %836 = vmatprep.subr.mxu0 %v252
    %837 = vmatpush1.msra.mxu0 %v251
    %838 = vmatprep.subr.mxu0 %v250
    %839 = vmatpush1.msra.mxu0 %v249
    %840 = vmatprep.subr.mxu0 %v248
    %841 = vmatpush1.msra.mxu0 %v247
    %842 = vmatprep.subr.mxu0 %v246
    %843 = vmatpush1.msra.mxu0 %v245
    %844 = vmatprep.subr.mxu0 %v244
    %845 = vmatpush1.msra.mxu0 %v243
    %846 = vmatprep.subr.mxu0 %v242
    %847 = vmatpush1.msra.mxu0 %v241
    %848 = vmatprep.subr.mxu0 0.0
    %849 = vmatpush2.msra.mxu0 0.0
    %850 = vmatprep.subr.mxu0 0.0
    %851 = vmatpush2.msra.mxu0 0.0
    %852 = vmatprep.subr.mxu0 0.0
    %853 = vmatpush2.msra.mxu0 0.0
    %854 = vmatprep.subr.mxu0 0.0
    %855 = vmatpush2.msra.mxu0 0.0
    %856 = vmatprep.subr.mxu0 0.0
    %857 = vmatpush2.msra.mxu0 0.0
    %858 = vmatprep.subr.mxu0 0.0
    %859 = vmatpush2.msra.mxu0 0.0
    %860 = vmatprep.subr.mxu0 0.0
    %861 = vmatpush2.msra.mxu0 0.0
    %862 = vmatprep.subr.mxu0 0.0
    %863 = vmatpush2.msra.mxu0 0.0
    %864 = vmatprep.subr.mxu0 0.0
    %865 = vmatpush2.msra.mxu0 0.0
    %866 = vmatprep.subr.mxu0 0.0
    %867 = vmatpush2.msra.mxu0 0.0
    %868 = vmatprep.subr.mxu0 0.0
    %869 = vmatpush2.msra.mxu0 0.0
    %870 = vmatprep.subr.mxu0 0.0
    %871 = vmatpush2.msra.mxu0 0.0
    %872 = vmatprep.subr.mxu0 0.0
    %873 = vmatpush2.msra.mxu0 0.0
    %874 = vmatprep.subr.mxu0 0.0
    %875 = vmatpush2.msra.mxu0 0.0
    %876 = vmatprep.subr.mxu0 0.0
    %877 = vmatpush2.msra.mxu0 0.0
    %878 = vmatprep.subr.mxu0 0.0
    %879 = vmatpush2.msra.mxu0 0.0
    %880 = vmatprep.mubr.f32.mxu0 0.0
    %881 = vmatmul.mubr.f32.gmra.mxu0 %v814
    %v882 = vpop.f32.mrf.mxu0
    %v883 = vadd.f32 0.0, %v882
    %v884 = vpop.f32.mrf.mxu0
    %v885 = vadd.f32 0.0, %v884
    %886 = vdwg.mxu0
    %v887 = vadd.f32 %v811, %v883
    %v888 = vadd.f32 %v812, %v885
    %v889 = vxor.u32 %v887, 2147483648
    %v890 = vxor.u32 %v888, 2147483648
    %v891 = vmul.f32 %v889, 1.442695
    %v892 = vpow.pop %v891
    %v893 = vmul.f32 %v890, 1.442695
    %v894 = vpow.pop %v893
    %v895 = vadd.f32 %v892, 1.0
    %v896 = vadd.f32 %v894, 1.0
    %v897 = vrcp.pop %v895
    %v898 = vmul.f32 1.0, %v897
    %v899 = vrcp.pop %v896
    %v900 = vmul.f32 1.0, %v899
    %v901 = vtanh.pop %v888
    %v902 = vmul.f32 %v898, %v801
    %904 = vrot.lane.b32.xlu0 %v901, 64
    %v905 = vpop.permute.xlu0 %904
    %v907 = vmul.f32 %v898, %v905
    %909 = vrot.lane.b32.xlu0 %v907, 64
    %v910 = vpop.permute.xlu0 %909
    %v912 = vadd.f32 %v902, %v910
    %v913 = vtanh.pop %v912
    %915 = vrot.lane.b32.xlu0 %v913, 64
    %v916 = vpop.permute.xlu0 %915
    %v918 = vmul.f32 %v900, %v916
    %s919 = smul.u32 6, 2
    %s920 = smul.addr %s919, 8
    %s921 = scalar_lea.vmem [#allocation2], %s920
    %v922 = vld [vmem:[%s921] sm:$0xff]
    %v923 = vld [vmem:[%s921 + $0x8] sm:$0xff]
    %v925 = vsel %vm257, %v918, 0
    %927 = vmatprep.subr.mxu0 0.0
    %928 = vmatpush1.msra.mxu0 0.0
    %929 = vmatprep.subr.mxu0 0.0
    %930 = vmatpush1.msra.mxu0 0.0
    %931 = vmatprep.subr.mxu0 0.0
    %932 = vmatpush1.msra.mxu0 0.0
    %933 = vmatprep.subr.mxu0 0.0
    %934 = vmatpush1.msra.mxu0 0.0
    %935 = vmatprep.subr.mxu0 0.0
    %936 = vmatpush1.msra.mxu0 0.0
    %937 = vmatprep.subr.mxu0 0.0
    %938 = vmatpush1.msra.mxu0 0.0
    %939 = vmatprep.subr.mxu0 0.0
    %940 = vmatpush1.msra.mxu0 0.0
    %941 = vmatprep.subr.mxu0 0.0
    %942 = vmatpush1.msra.mxu0 0.0
    %943 = vmatprep.subr.mxu0 %v256
    %944 = vmatpush1.msra.mxu0 %v255
    %945 = vmatprep.subr.mxu0 %v254
    %946 = vmatpush1.msra.mxu0 %v253
    %947 = vmatprep.subr.mxu0 %v252
    %948 = vmatpush1.msra.mxu0 %v251
    %949 = vmatprep.subr.mxu0 %v250
    %950 = vmatpush1.msra.mxu0 %v249
    %951 = vmatprep.subr.mxu0 %v248
    %952 = vmatpush1.msra.mxu0 %v247
    %953 = vmatprep.subr.mxu0 %v246
    %954 = vmatpush1.msra.mxu0 %v245
    %955 = vmatprep.subr.mxu0 %v244
    %956 = vmatpush1.msra.mxu0 %v243
    %957 = vmatprep.subr.mxu0 %v242
    %958 = vmatpush1.msra.mxu0 %v241
    %959 = vmatprep.subr.mxu0 0.0
    %960 = vmatpush2.msra.mxu0 0.0
    %961 = vmatprep.subr.mxu0 0.0
    %962 = vmatpush2.msra.mxu0 0.0
    %963 = vmatprep.subr.mxu0 0.0
    %964 = vmatpush2.msra.mxu0 0.0
    %965 = vmatprep.subr.mxu0 0.0
    %966 = vmatpush2.msra.mxu0 0.0
    %967 = vmatprep.subr.mxu0 0.0
    %968 = vmatpush2.msra.mxu0 0.0
    %969 = vmatprep.subr.mxu0 0.0
    %970 = vmatpush2.msra.mxu0 0.0
    %971 = vmatprep.subr.mxu0 0.0
    %972 = vmatpush2.msra.mxu0 0.0
    %973 = vmatprep.subr.mxu0 0.0
    %974 = vmatpush2.msra.mxu0 0.0
    %975 = vmatprep.subr.mxu0 0.0
    %976 = vmatpush2.msra.mxu0 0.0
    %977 = vmatprep.subr.mxu0 0.0
    %978 = vmatpush2.msra.mxu0 0.0
    %979 = vmatprep.subr.mxu0 0.0
    %980 = vmatpush2.msra.mxu0 0.0
    %981 = vmatprep.subr.mxu0 0.0
    %982 = vmatpush2.msra.mxu0 0.0
    %983 = vmatprep.subr.mxu0 0.0
    %984 = vmatpush2.msra.mxu0 0.0
    %985 = vmatprep.subr.mxu0 0.0
    %986 = vmatpush2.msra.mxu0 0.0
    %987 = vmatprep.subr.mxu0 0.0
    %988 = vmatpush2.msra.mxu0 0.0
    %989 = vmatprep.subr.mxu0 0.0
    %990 = vmatpush2.msra.mxu0 0.0
    %991 = vmatprep.mubr.f32.mxu0 0.0
    %992 = vmatmul.mubr.f32.gmra.mxu0 %v925
    %v993 = vpop.f32.mrf.mxu0
    %v994 = vadd.f32 0.0, %v993
    %v995 = vpop.f32.mrf.mxu0
    %v996 = vadd.f32 0.0, %v995
    %997 = vdwg.mxu0
    %v998 = vadd.f32 %v922, %v994
    %v999 = vadd.f32 %v923, %v996
    %v1000 = vxor.u32 %v998, 2147483648
    %v1001 = vxor.u32 %v999, 2147483648
    %v1002 = vmul.f32 %v1000, 1.442695
    %v1003 = vpow.pop %v1002
    %v1004 = vmul.f32 %v1001, 1.442695
    %v1005 = vpow.pop %v1004
    %v1006 = vadd.f32 %v1003, 1.0
    %v1007 = vadd.f32 %v1005, 1.0
    %v1008 = vrcp.pop %v1006
    %v1009 = vmul.f32 1.0, %v1008
    %v1010 = vrcp.pop %v1007
    %v1011 = vmul.f32 1.0, %v1010
    %v1012 = vtanh.pop %v999
    %v1013 = vmul.f32 %v1009, %v912
    %1015 = vrot.lane.b32.xlu0 %v1012, 64
    %v1016 = vpop.permute.xlu0 %1015
    %v1018 = vmul.f32 %v1009, %v1016
    %1020 = vrot.lane.b32.xlu0 %v1018, 64
    %v1021 = vpop.permute.xlu0 %1020
    %v1023 = vadd.f32 %v1013, %v1021
    %v1024 = vtanh.pop %v1023
    %1026 = vrot.lane.b32.xlu0 %v1024, 64
    %v1027 = vpop.permute.xlu0 %1026
    %v1029 = vmul.f32 %v1011, %v1027
    %s1030 = smul.u32 7, 2
    %s1031 = smul.addr %s1030, 8
    %s1032 = scalar_lea.vmem [#allocation2], %s1031
    %v1033 = vld [vmem:[%s1032] sm:$0xff]
    %v1034 = vld [vmem:[%s1032 + $0x8] sm:$0xff]
    %v1036 = vsel %vm257, %v1029, 0
    %1038 = vmatprep.subr.mxu0 0.0
    %1039 = vmatpush1.msra.mxu0 0.0
    %1040 = vmatprep.subr.mxu0 0.0
    %1041 = vmatpush1.msra.mxu0 0.0
    %1042 = vmatprep.subr.mxu0 0.0
    %1043 = vmatpush1.msra.mxu0 0.0
    %1044 = vmatprep.subr.mxu0 0.0
    %1045 = vmatpush1.msra.mxu0 0.0
    %1046 = vmatprep.subr.mxu0 0.0
    %1047 = vmatpush1.msra.mxu0 0.0
    %1048 = vmatprep.subr.mxu0 0.0
    %1049 = vmatpush1.msra.mxu0 0.0
    %1050 = vmatprep.subr.mxu0 0.0
    %1051 = vmatpush1.msra.mxu0 0.0
    %1052 = vmatprep.subr.mxu0 0.0
    %1053 = vmatpush1.msra.mxu0 0.0
    %1054 = vmatprep.subr.mxu0 %v256
    %1055 = vmatpush1.msra.mxu0 %v255
    %1056 = vmatprep.subr.mxu0 %v254
    %1057 = vmatpush1.msra.mxu0 %v253
    %1058 = vmatprep.subr.mxu0 %v252
    %1059 = vmatpush1.msra.mxu0 %v251
    %1060 = vmatprep.subr.mxu0 %v250
    %1061 = vmatpush1.msra.mxu0 %v249
    %1062 = vmatprep.subr.mxu0 %v248
    %1063 = vmatpush1.msra.mxu0 %v247
    %1064 = vmatprep.subr.mxu0 %v246
    %1065 = vmatpush1.msra.mxu0 %v245
    %1066 = vmatprep.subr.mxu0 %v244
    %1067 = vmatpush1.msra.mxu0 %v243
    %1068 = vmatprep.subr.mxu0 %v242
    %1069 = vmatpush1.msra.mxu0 %v241
    %1070 = vmatprep.subr.mxu0 0.0
    %1071 = vmatpush2.msra.mxu0 0.0
    %1072 = vmatprep.subr.mxu0 0.0
    %1073 = vmatpush2.msra.mxu0 0.0
    %1074 = vmatprep.subr.mxu0 0.0
    %1075 = vmatpush2.msra.mxu0 0.0
    %1076 = vmatprep.subr.mxu0 0.0
    %1077 = vmatpush2.msra.mxu0 0.0
    %1078 = vmatprep.subr.mxu0 0.0
    %1079 = vmatpush2.msra.mxu0 0.0
    %1080 = vmatprep.subr.mxu0 0.0
    %1081 = vmatpush2.msra.mxu0 0.0
    %1082 = vmatprep.subr.mxu0 0.0
    %1083 = vmatpush2.msra.mxu0 0.0
    %1084 = vmatprep.subr.mxu0 0.0
    %1085 = vmatpush2.msra.mxu0 0.0
    %1086 = vmatprep.subr.mxu0 0.0
    %1087 = vmatpush2.msra.mxu0 0.0
    %1088 = vmatprep.subr.mxu0 0.0
    %1089 = vmatpush2.msra.mxu0 0.0
    %1090 = vmatprep.subr.mxu0 0.0
    %1091 = vmatpush2.msra.mxu0 0.0
    %1092 = vmatprep.subr.mxu0 0.0
    %1093 = vmatpush2.msra.mxu0 0.0
    %1094 = vmatprep.subr.mxu0 0.0
    %1095 = vmatpush2.msra.mxu0 0.0
    %1096 = vmatprep.subr.mxu0 0.0
    %1097 = vmatpush2.msra.mxu0 0.0
    %1098 = vmatprep.subr.mxu0 0.0
    %1099 = vmatpush2.msra.mxu0 0.0
    %1100 = vmatprep.subr.mxu0 0.0
    %1101 = vmatpush2.msra.mxu0 0.0
    %1102 = vmatprep.mubr.f32.mxu0 0.0
    %1103 = vmatmul.mubr.f32.gmra.mxu0 %v1036
    %v1104 = vpop.f32.mrf.mxu0
    %v1105 = vadd.f32 0.0, %v1104
    %v1106 = vpop.f32.mrf.mxu0
    %v1107 = vadd.f32 0.0, %v1106
    %1108 = vdwg.mxu0
    %v1109 = vadd.f32 %v1033, %v1105
    %v1110 = vadd.f32 %v1034, %v1107
    %v1111 = vxor.u32 %v1109, 2147483648
    %v1112 = vxor.u32 %v1110, 2147483648
    %v1113 = vmul.f32 %v1111, 1.442695
    %v1114 = vpow.pop %v1113
    %v1115 = vmul.f32 %v1112, 1.442695
    %v1116 = vpow.pop %v1115
    %v1117 = vadd.f32 %v1114, 1.0
    %v1118 = vadd.f32 %v1116, 1.0
    %v1119 = vrcp.pop %v1117
    %v1120 = vmul.f32 1.0, %v1119
    %v1121 = vrcp.pop %v1118
    %v1122 = vmul.f32 1.0, %v1121
    %v1123 = vtanh.pop %v1110
    %v1124 = vmul.f32 %v1120, %v1023
    %1126 = vrot.lane.b32.xlu0 %v1123, 64
    %v1127 = vpop.permute.xlu0 %1126
    %v1129 = vmul.f32 %v1120, %v1127
    %1131 = vrot.lane.b32.xlu0 %v1129, 64
    %v1132 = vpop.permute.xlu0 %1131
    %v1134 = vadd.f32 %v1124, %v1132
    %v1135 = vtanh.pop %v1134
    %1137 = vrot.lane.b32.xlu0 %v1135, 64
    %v1138 = vpop.permute.xlu0 %1137
    %v1140 = vmul.f32 %v1122, %v1138
    %v1141 = vld [vmem:[%s4] sm:$0x1]
    %v1143 = vlaneseq
    %v1144 = vshrl.u32 %v1143, 7
    %v1145 = vsub.s32 0, %v1144
    %v1146 = vrot.slane %v1141, %v1145
    %v1148 = vmul.f32 %v1140, %v1146
    %v1149 = vsel %vm257, %v1148, 0.0
    %1150 = vadd.xlane.f32.xlu0 %v1149
    %v1151 = vpop.xlane.xlu0 %1150
    %v1152 = vld [vmem:[#allocation3] sm:$0x1]
    %v1154 = vlaneseq
    %v1155 = vshrl.u32 %v1154, 7
    %v1156 = vsub.s32 0, %v1155
    %v1157 = vrot.slane %v1152, %v1156
    %v1159 = vadd.f32 %v1151, %v1157
    %vm1160 = vcmask 7168
    %1161 = vst.msk [vmem:[%s6] sm:$0xff] %vm1160, %v1159
    // Predicated region
    $region30: #{tpu_custom_call.1} parent=1 // pred_check
      _
    $region31: #{tpu_custom_call.1} parent=1 // pred_check_branch
      %1163 = sbr.rel (0) target = $region33
    $region32: #{tpu_custom_call.1} parent=1 // pred_region
      _
    $region33: #{tpu_custom_call.1} parent=1 // pred_fallthru
      _
    // Predicated region
    $region34: #{tpu_custom_call.1} parent=1 // pred_check
      _
    $region35: #{tpu_custom_call.1} parent=1 // pred_check_branch
      %1165 = sbr.rel (0) target = $region37
    $region36: #{tpu_custom_call.1} parent=1 // pred_region
      _
    $region37: #{tpu_custom_call.1} parent=1 // pred_fallthru
      _
    %1166 = vsyncpa [#allocation5], 1

</llo_original>
